<compile_context>
chip_gen: v6e
topology: v6e:2x2x1
jax: 0.10.0
libtpu: 0.0.40
codegen_flags: <defaults>
</compile_context>

<pallas_src>
import math

import jax
import jax.numpy as jnp
from jax.experimental import pallas as pl
from jax.experimental.pallas import tpu as pltpu


def _round_up(n, m):
    return ((n + m - 1) // m) * m


def _critic_kernel(x_ref, w1_ref, b1_ref, w2_ref, b2_ref, w3_ref, b3_ref, o_ref):
    # Feature-major: batch is the lane axis, so every matmul output and the
    # final store are lane-dense.
    h1 = jnp.dot(w1_ref[...], x_ref[...], preferred_element_type=jnp.float32)
    h1 = jnp.maximum(h1 + b1_ref[...], 0.0)                     # (64, bt)

    h2 = jnp.dot(w2_ref[...], h1, preferred_element_type=jnp.float32)
    h2 = jnp.maximum(h2 + b2_ref[...], 0.0)                     # (32, bt)

    q = jnp.dot(w3_ref[...], h2, preferred_element_type=jnp.float32)
    q = q + b3_ref[...]                                         # (1, bt)
    o_ref[...] = q.astype(o_ref.dtype)                          # lane-dense store


def critic_forward(state, action, params, *, block_b=4096, min_grid=1):
    """state: (B, input_dim), action: (B, action_dim) -> Q: (B, 1).

    min_grid=2 is recommended on v7x (2 TensorCores) when B is large enough
    to split; it is a pure tiling choice and does not change results.
    """
    w1, b1, w2, b2, w3, b3 = params
    B, input_dim = state.shape
    action_dim = action.shape[1]
    F = input_dim + action_dim

    # Balanced batch tiling: few fat tiles, lane-aligned, minimal padding.
    grid_n = max(pl.cdiv(B, block_b), min_grid)
    bt = _round_up(pl.cdiv(B, grid_n), 128)
    B_pad = grid_n * bt

    # Pack state||action once and go feature-major: (F, B_pad).
    x = jnp.concatenate([state, action], axis=1)                # (B, F)
    if B_pad != B:
        x = jnp.pad(x, ((0, B_pad - B), (0, 0)))
    x = x.T                                                     # (F, B_pad)

    def resident(arr):
        # Same block every grid step -> DMAed once, stays VMEM-resident.
        return pl.BlockSpec(arr.shape, lambda i: (0, 0))

    out = pl.pallas_call(
        _critic_kernel,
        out_shape=jax.ShapeDtypeStruct((1, B_pad), jnp.float32),
        grid=(grid_n,),
        in_specs=[
            pl.BlockSpec((F, bt), lambda i: (0, i)),            # input tile
            resident(w1), resident(b1),
            resident(w2), resident(b2),
            resident(w3), resident(b3),
        ],
        out_specs=pl.BlockSpec((1, bt), lambda i: (0, i)),      # lane-dense out
        compiler_params=pltpu.CompilerParams(
            dimension_semantics=("parallel",)),
    )(x, w1, b1, w2, b2, w3, b3)

    # (1, B_pad) -> (B, 1); padded columns are sliced off.
    return out[0, :B, None]


def init_critic_params(key, input_dim, action_dim):
    """Mirror nn.Linear init U(-1/sqrt(fan_in), 1/sqrt(fan_in)).

    Weights keep PyTorch layout (out_features, in_features); biases are stored
    as (out_features, 1) columns so they broadcast over the lane (batch) axis
    in the feature-major kernel.
    """
    dims = [(input_dim + action_dim, 64), (64, 32), (32, 1)]
    params = []
    for fan_in, fan_out in dims:
        key, kw, kb = jax.random.split(key, 3)
        bound = 1.0 / math.sqrt(fan_in)
        w = jax.random.uniform(kw, (fan_out, fan_in), jnp.float32, -bound, bound)
        b = jax.random.uniform(kb, (fan_out, 1), jnp.float32, -bound, bound)
        params += [w, b]
    return tuple(params)


def _reference(state, action, params):
    w1, b1, w2, b2, w3, b3 = params
    x = jnp.concatenate([state, action], axis=1)
    h = jnp.maximum(x @ w1.T + b1.T, 0.0)
    h = jnp.maximum(h @ w2.T + b2.T, 0.0)
    return h @ w3.T + b3.T


if __name__ == "__main__":
    input_dim = 8
    action_dim = 2

    key = jax.random.PRNGKey(0)
    k_state, k_action, k_params = jax.random.split(key, 3)
    params = init_critic_params(k_params, input_dim, action_dim)

    # Small case (module-typical toy batch) -> single 128-lane tile.
    batch = 2
    state = jax.random.normal(k_state, (batch, input_dim), jnp.float32)
    action = jax.random.normal(k_action, (batch, action_dim), jnp.float32)
    q = critic_forward(state, action, params)
    jax.block_until_ready(q)
    assert q.shape == (batch, 1)
    assert jnp.allclose(q, _reference(state, action, params), atol=1e-5, rtol=1e-5)

    # Larger case: multi-tile grid (3 tiles of 256), balanced padding,
    # resident-weight path.
    batch2 = 600
    k_s2, k_a2 = jax.random.split(jax.random.PRNGKey(1))
    state2 = jax.random.normal(k_s2, (batch2, input_dim), jnp.float32)
    action2 = jax.random.normal(k_a2, (batch2, action_dim), jnp.float32)
    q2 = critic_forward(state2, action2, params, block_b=256)
    jax.block_until_ready(q2)
    assert q2.shape == (batch2, 1)
    assert jnp.allclose(q2, _reference(state2, action2, params),
                        atol=1e-5, rtol=1e-5)

    # min_grid=2 tiling (keeps both v7x TensorCores busy); same semantics.
    q3 = critic_forward(state2, action2, params, min_grid=2)
    jax.block_until_ready(q3)
    assert q3.shape == (batch2, 1)
    assert jnp.allclose(q3, _reference(state2, action2, params),
                        atol=1e-5, rtol=1e-5)

    print("KERNEL_OK")
</pallas_src>

<mosaic_0001>
module attributes {stable_mosaic.version = 11 : i64} {
  func.func @_critic_kernel(%arg0: i32, %arg1: memref<10x128xf32, #tpu.memory_space<vmem>>, %arg2: memref<64x10xf32, #tpu.memory_space<vmem>>, %arg3: memref<64x1xf32, #tpu.memory_space<vmem>>, %arg4: memref<32x64xf32, #tpu.memory_space<vmem>>, %arg5: memref<32x1xf32, #tpu.memory_space<vmem>>, %arg6: memref<1x32xf32, #tpu.memory_space<vmem>>, %arg7: memref<1x1xf32, #tpu.memory_space<vmem>>, %arg8: memref<1x128xf32, #tpu.memory_space<vmem>>) attributes {dimension_semantics = [#tpu.dimension_semantics<parallel>], iteration_bounds = array<i64: 1>, scalar_prefetch = 0 : i64, scratch_operands = 0 : i64, tpu.core_type = #tpu.core_type<tc>, window_params = [{transform_indices = @transform_0, window_bounds = array<i64: 10, 128>}, {pipeline_mode = #tpu.pipeline_mode<synchronous>, transform_indices = @transform_1, window_bounds = array<i64: 64, 10>}, {pipeline_mode = #tpu.pipeline_mode<synchronous>, transform_indices = @transform_2, window_bounds = array<i64: 64, 1>}, {pipeline_mode = #tpu.pipeline_mode<synchronous>, transform_indices = @transform_3, window_bounds = array<i64: 32, 64>}, {pipeline_mode = #tpu.pipeline_mode<synchronous>, transform_indices = @transform_4, window_bounds = array<i64: 32, 1>}, {pipeline_mode = #tpu.pipeline_mode<synchronous>, transform_indices = @transform_5, window_bounds = array<i64: 1, 32>}, {pipeline_mode = #tpu.pipeline_mode<synchronous>, transform_indices = @transform_6, window_bounds = array<i64: 1, 1>}, {transform_indices = @transform_7, window_bounds = array<i64: 1, 128>}]} {
    %c0 = arith.constant 0 : index
    %c0_0 = arith.constant 0 : index
    %0 = vector.load %arg2[%c0, %c0_0] : memref<64x10xf32, #tpu.memory_space<vmem>>, vector<64x10xf32>
    %c0_1 = arith.constant 0 : index
    %c0_2 = arith.constant 0 : index
    %1 = vector.load %arg1[%c0_1, %c0_2] : memref<10x128xf32, #tpu.memory_space<vmem>>, vector<10x128xf32>
    %cst = arith.constant dense<0.000000e+00> : vector<64x128xf32>
    %2 = tpu.matmul %0, %1, %cst {dimension_numbers = #tpu.dot_dimension_numbers<[1], [0], [0], [1], [0, 0, 1, 1], [], []>} : vector<64x10xf32>, vector<10x128xf32>, vector<64x128xf32> -> vector<64x128xf32>
    %c0_3 = arith.constant 0 : index
    %c0_4 = arith.constant 0 : index
    %3 = vector.load %arg3[%c0_3, %c0_4] : memref<64x1xf32, #tpu.memory_space<vmem>>, vector<64x1xf32>
    %4 = vector.broadcast %3 : vector<64x1xf32> to vector<64x128xf32>
    %5 = arith.addf %2, %4 : vector<64x128xf32>
    %cst_5 = arith.constant 0.000000e+00 : f32
    %6 = vector.broadcast %cst_5 : f32 to vector<64x128xf32>
    %7 = arith.maximumf %5, %6 : vector<64x128xf32>
    %c0_6 = arith.constant 0 : index
    %c0_7 = arith.constant 0 : index
    %8 = vector.load %arg4[%c0_6, %c0_7] : memref<32x64xf32, #tpu.memory_space<vmem>>, vector<32x64xf32>
    %cst_8 = arith.constant dense<0.000000e+00> : vector<32x128xf32>
    %9 = tpu.matmul %8, %7, %cst_8 {dimension_numbers = #tpu.dot_dimension_numbers<[1], [0], [0], [1], [0, 0, 1, 1], [], []>} : vector<32x64xf32>, vector<64x128xf32>, vector<32x128xf32> -> vector<32x128xf32>
    %c0_9 = arith.constant 0 : index
    %c0_10 = arith.constant 0 : index
    %10 = vector.load %arg5[%c0_9, %c0_10] : memref<32x1xf32, #tpu.memory_space<vmem>>, vector<32x1xf32>
    %11 = vector.broadcast %10 : vector<32x1xf32> to vector<32x128xf32>
    %12 = arith.addf %9, %11 : vector<32x128xf32>
    %cst_11 = arith.constant 0.000000e+00 : f32
    %13 = vector.broadcast %cst_11 : f32 to vector<32x128xf32>
    %14 = arith.maximumf %12, %13 : vector<32x128xf32>
    %c0_12 = arith.constant 0 : index
    %c0_13 = arith.constant 0 : index
    %15 = vector.load %arg6[%c0_12, %c0_13] : memref<1x32xf32, #tpu.memory_space<vmem>>, vector<1x32xf32>
    %cst_14 = arith.constant dense<0.000000e+00> : vector<1x128xf32>
    %16 = tpu.matmul %15, %14, %cst_14 {dimension_numbers = #tpu.dot_dimension_numbers<[1], [0], [0], [1], [0, 0, 1, 1], [], []>} : vector<1x32xf32>, vector<32x128xf32>, vector<1x128xf32> -> vector<1x128xf32>
    %c0_15 = arith.constant 0 : index
    %c0_16 = arith.constant 0 : index
    %17 = vector.load %arg7[%c0_15, %c0_16] : memref<1x1xf32, #tpu.memory_space<vmem>>, vector<1x1xf32>
    %18 = vector.broadcast %17 : vector<1x1xf32> to vector<1x128xf32>
    %19 = arith.addf %16, %18 : vector<1x128xf32>
    %c0_17 = arith.constant 0 : index
    %c0_18 = arith.constant 0 : index
    %20 = vector.load %arg8[%c0_17, %c0_18] : memref<1x128xf32, #tpu.memory_space<vmem>>, vector<1x128xf32>
    tpu.vector_store %arg8[%c0_17, %c0_18], %19 {strides = array<i32>} : memref<1x128xf32, #tpu.memory_space<vmem>>, vector<1x128xf32>,
    return
  }
  func.func @transform_0(%arg0: i32) -> (i32, i32) {
    %c0_i32 = arith.constant 0 : i32
    %c0_i32_0 = arith.constant 0 : i32
    return %c0_i32, %arg0 : i32, i32
  }
  func.func @transform_1(%arg0: i32) -> (i32, i32) {
    %c0_i32 = arith.constant 0 : i32
    %c0_i32_0 = arith.constant 0 : i32
    %c0_i32_1 = arith.constant 0 : i32
    return %c0_i32, %c0_i32_0 : i32, i32
  }
  func.func @transform_2(%arg0: i32) -> (i32, i32) {
    %c0_i32 = arith.constant 0 : i32
    %c0_i32_0 = arith.constant 0 : i32
    %c0_i32_1 = arith.constant 0 : i32
    return %c0_i32, %c0_i32_0 : i32, i32
  }
  func.func @transform_3(%arg0: i32) -> (i32, i32) {
    %c0_i32 = arith.constant 0 : i32
    %c0_i32_0 = arith.constant 0 : i32
    %c0_i32_1 = arith.constant 0 : i32
    return %c0_i32, %c0_i32_0 : i32, i32
  }
  func.func @transform_4(%arg0: i32) -> (i32, i32) {
    %c0_i32 = arith.constant 0 : i32
    %c0_i32_0 = arith.constant 0 : i32
    %c0_i32_1 = arith.constant 0 : i32
    return %c0_i32, %c0_i32_0 : i32, i32
  }
  func.func @transform_5(%arg0: i32) -> (i32, i32) {
    %c0_i32 = arith.constant 0 : i32
    %c0_i32_0 = arith.constant 0 : i32
    %c0_i32_1 = arith.constant 0 : i32
    return %c0_i32, %c0_i32_0 : i32, i32
  }
  func.func @transform_6(%arg0: i32) -> (i32, i32) {
    %c0_i32 = arith.constant 0 : i32
    %c0_i32_0 = arith.constant 0 : i32
    %c0_i32_1 = arith.constant 0 : i32
    return %c0_i32, %c0_i32_0 : i32, i32
  }
  func.func @transform_7(%arg0: i32) -> (i32, i32) {
    %c0_i32 = arith.constant 0 : i32
    %c0_i32_0 = arith.constant 0 : i32
    return %c0_i32, %arg0 : i32, i32
  }
}

</mosaic_0001>

<llo_original>
// kernel: tpu_custom_call.1
$region0: #{tpu_custom_call.1}
  #allocation0 [shape = 'u32[]', space=smem, size = 0x4, offset = 0x4, fixed_abs, tag = 'smem constant byte address 0x4 - core index']
  #allocation1 [shape = 'u32[144,128]{1,0:T(1,128)}', space=vmem, size = 0x12000, scoped, tag = 'internal scratch']
  #allocation2 [shape = 'f32[1,1]{1,0:T(1,128)S(1)}', space=vmem, size = 0x200, scoped, tag = 'scoped memory for tpu_custom_call.1']
  %s0 = inlined_call_operand.vmem [shape: f32[10,128], index: 0, kind: input, shape index: {}]
  %s1 = inlined_call_operand.vmem [shape: f32[64,10], index: 1, kind: input, shape index: {}]
  %s2 = inlined_call_operand.vmem [shape: f32[64,1], index: 2, kind: input, shape index: {}]
  %s3 = inlined_call_operand.vmem [shape: f32[32,64], index: 3, kind: input, shape index: {}]
  %s4 = inlined_call_operand.vmem [shape: f32[32,1], index: 4, kind: input, shape index: {}]
  %s5 = inlined_call_operand.vmem [shape: f32[1,32], index: 5, kind: input, shape index: {}]
  %s6 = inlined_call_operand.<no memory space> [shape: f32[1,1], index: 6, kind: input, shape index: {}]
  %s7 = inlined_call_operand.hbm [shape: f32[1,128], index: 7, kind: output, shape index: {}]
  %s8 = sld [smem:[#allocation0]]
  $region38: #{tpu_custom_call.1} parent=0
    _
  %s10 = ssub.s32 1, %s8
  %s11 = scalar_select 0, %s10, %s8
  %v12 = vstv %s6
  %13 = vst [vmem:[#allocation2] sm:$0x1] %v12
  $region1: #{tpu_custom_call.1} parent=0
    #allocation3 [shape = 'u8[512]{0}', space=vmem, size = 0x400, scoped, tag = 'output window, operand 0, single buffered']
    #allocation4 [shape = 's32[1]{0}', space=sflag, size = 0x4, scoped, tag = 'scoped memory for tpu_custom_call.1']
    %14 = vsyncpa [#allocation4], 0
    // Predicated region
    $region2: #{tpu_custom_call.1} parent=1 // pred_check
      _
    $region3: #{tpu_custom_call.1} parent=1 // pred_check_branch
      %16 = sbr.rel (0) target = $region5
    $region4: #{tpu_custom_call.1} parent=1 // pred_region
      _
    $region5: #{tpu_custom_call.1} parent=1 // pred_fallthru
      _
    // Predicated region
    $region6: #{tpu_custom_call.1} parent=1 // pred_check
      _
    $region7: #{tpu_custom_call.1} parent=1 // pred_check_branch
      %18 = sbr.rel (0) target = $region9
    $region8: #{tpu_custom_call.1} parent=1 // pred_region
      _
    $region9: #{tpu_custom_call.1} parent=1 // pred_fallthru
      _
    // Predicated region
    $region10: #{tpu_custom_call.1} parent=1 // pred_check
      _
    $region11: #{tpu_custom_call.1} parent=1 // pred_check_branch
      %20 = sbr.rel (0) target = $region13
    $region12: #{tpu_custom_call.1} parent=1 // pred_region
      _
    $region13: #{tpu_custom_call.1} parent=1 // pred_fallthru
      _
    // Predicated region
    $region14: #{tpu_custom_call.1} parent=1 // pred_check
      _
    $region15: #{tpu_custom_call.1} parent=1 // pred_check_branch
      %22 = sbr.rel (0) target = $region17
    $region16: #{tpu_custom_call.1} parent=1 // pred_region
      _
    $region17: #{tpu_custom_call.1} parent=1 // pred_fallthru
      _
    // Predicated region
    $region18: #{tpu_custom_call.1} parent=1 // pred_check
      _
    $region19: #{tpu_custom_call.1} parent=1 // pred_check_branch
      %24 = sbr.rel (0) target = $region21
    $region20: #{tpu_custom_call.1} parent=1 // pred_region
      _
    $region21: #{tpu_custom_call.1} parent=1 // pred_fallthru
      _
    // Predicated region
    $region22: #{tpu_custom_call.1} parent=1 // pred_check
      _
    $region23: #{tpu_custom_call.1} parent=1 // pred_check_branch
      %26 = sbr.rel (0) target = $region25
    $region24: #{tpu_custom_call.1} parent=1 // pred_region
      _
    $region25: #{tpu_custom_call.1} parent=1 // pred_fallthru
      _
    // Predicated region
    $region26: #{tpu_custom_call.1} parent=1 // pred_check
      _
    $region27: #{tpu_custom_call.1} parent=1 // pred_check_branch
      %28 = sbr.rel (0) target = $region29
    $region28: #{tpu_custom_call.1} parent=1 // pred_region
      _
    $region29: #{tpu_custom_call.1} parent=1 // pred_fallthru
      _
    %v29 = vld [vmem:[%s1] sm:$0xff]
    %v30 = vld [vmem:[%s1 + $0x8] sm:$0xff]
    %v31 = vld [vmem:[%s1 + $0x10] sm:$0xff]
    %v32 = vld [vmem:[%s1 + $0x18] sm:$0xff]
    %v33 = vld [vmem:[%s1 + $0x20] sm:$0xff]
    %v34 = vld [vmem:[%s1 + $0x28] sm:$0xff]
    %v35 = vld [vmem:[%s1 + $0x30] sm:$0xff]
    %v36 = vld [vmem:[%s1 + $0x38] sm:$0xff]
    %v37 = vld [vmem:[%s0] sm:$0xff]
    %v38 = vld [vmem:[%s0 + $0x8] sm:$0x3]
    %v39 = vld [vmem:[%s2] sm:$0xff]
    %v40 = vld [vmem:[%s2 + $0x8] sm:$0xff]
    %v41 = vld [vmem:[%s2 + $0x10] sm:$0xff]
    %v42 = vld [vmem:[%s2 + $0x18] sm:$0xff]
    %v43 = vld [vmem:[%s2 + $0x20] sm:$0xff]
    %v44 = vld [vmem:[%s2 + $0x28] sm:$0xff]
    %v45 = vld [vmem:[%s2 + $0x30] sm:$0xff]
    %v46 = vld [vmem:[%s2 + $0x38] sm:$0xff]
    %48 = vset.pattern.permute.xlu0 0
    %49 = vperm.xlu0 %48, %v39
    %v50 = vpop.permute.xlu0 %49
    %53 = vset.pattern.permute.xlu0 0
    %54 = vperm.xlu0 %53, %v40
    %v55 = vpop.permute.xlu0 %54
    %58 = vset.pattern.permute.xlu0 0
    %59 = vperm.xlu0 %58, %v41
    %v60 = vpop.permute.xlu0 %59
    %63 = vset.pattern.permute.xlu0 0
    %64 = vperm.xlu0 %63, %v42
    %v65 = vpop.permute.xlu0 %64
    %68 = vset.pattern.permute.xlu0 0
    %69 = vperm.xlu0 %68, %v43
    %v70 = vpop.permute.xlu0 %69
    %73 = vset.pattern.permute.xlu0 0
    %74 = vperm.xlu0 %73, %v44
    %v75 = vpop.permute.xlu0 %74
    %78 = vset.pattern.permute.xlu0 0
    %79 = vperm.xlu0 %78, %v45
    %v80 = vpop.permute.xlu0 %79
    %83 = vset.pattern.permute.xlu0 0
    %84 = vperm.xlu0 %83, %v46
    %v85 = vpop.permute.xlu0 %84
    %vm87 = vcmask 80896
    %v89 = vsel %vm87, %v29, 0
    %v92 = vsel %vm87, %v30, 0
    %v95 = vsel %vm87, %v31, 0
    %v98 = vsel %vm87, %v32, 0
    %v101 = vsel %vm87, %v33, 0
    %v104 = vsel %vm87, %v34, 0
    %v107 = vsel %vm87, %v35, 0
    %v110 = vsel %vm87, %v36, 0
    %vm112 = vcmask 1041408
    %v114 = vsel %vm112, %v38, 0
    %116 = vmatprep.subr.mxu0 0.0
    %117 = vmatpush1.msra.mxu0 0.0
    %118 = vmatprep.subr.mxu0 0.0
    %119 = vmatpush1.msra.mxu0 0.0
    %120 = vmatprep.subr.mxu0 0.0
    %121 = vmatpush1.msra.mxu0 0.0
    %122 = vmatprep.subr.mxu0 0.0
    %123 = vmatpush1.msra.mxu0 0.0
    %124 = vmatprep.subr.mxu0 0.0
    %125 = vmatpush1.msra.mxu0 0.0
    %126 = vmatprep.subr.mxu0 0.0
    %127 = vmatpush1.msra.mxu0 0.0
    %128 = vmatprep.subr.mxu0 0.0
    %129 = vmatpush1.msra.mxu0 0.0
    %130 = vmatprep.subr.mxu0 0.0
    %131 = vmatpush1.msra.mxu0 0.0
    %132 = vmatprep.subr.mxu0 0.0
    %133 = vmatpush1.msra.mxu0 0.0
    %134 = vmatprep.subr.mxu0 0.0
    %135 = vmatpush1.msra.mxu0 0.0
    %136 = vmatprep.subr.mxu0 0.0
    %137 = vmatpush1.msra.mxu0 0.0
    %138 = vmatprep.subr.mxu0 0.0
    %139 = vmatpush1.msra.mxu0 0.0
    %140 = vmatprep.subr.mxu0 0.0
    %141 = vmatpush1.msra.mxu0 0.0
    %142 = vmatprep.subr.mxu0 0.0
    %143 = vmatpush1.msra.mxu0 0.0
    %144 = vmatprep.subr.mxu0 0.0
    %145 = vmatpush1.msra.mxu0 %v114
    %146 = vmatprep.subr.mxu0 0.0
    %147 = vmatpush1.msra.mxu0 %v37
    %148 = vmatprep.subr.mxu0 0.0
    %149 = vmatpush2.msra.mxu0 0.0
    %150 = vmatprep.subr.mxu0 0.0
    %151 = vmatpush2.msra.mxu0 0.0
    %152 = vmatprep.subr.mxu0 0.0
    %153 = vmatpush2.msra.mxu0 0.0
    %154 = vmatprep.subr.mxu0 0.0
    %155 = vmatpush2.msra.mxu0 0.0
    %156 = vmatprep.subr.mxu0 0.0
    %157 = vmatpush2.msra.mxu0 0.0
    %158 = vmatprep.subr.mxu0 0.0
    %159 = vmatpush2.msra.mxu0 0.0
    %160 = vmatprep.subr.mxu0 0.0
    %161 = vmatpush2.msra.mxu0 0.0
    %162 = vmatprep.subr.mxu0 0.0
    %163 = vmatpush2.msra.mxu0 0.0
    %164 = vmatprep.subr.mxu0 0.0
    %165 = vmatpush2.msra.mxu0 0.0
    %166 = vmatprep.subr.mxu0 0.0
    %167 = vmatpush2.msra.mxu0 0.0
    %168 = vmatprep.subr.mxu0 0.0
    %169 = vmatpush2.msra.mxu0 0.0
    %170 = vmatprep.subr.mxu0 0.0
    %171 = vmatpush2.msra.mxu0 0.0
    %172 = vmatprep.subr.mxu0 0.0
    %173 = vmatpush2.msra.mxu0 0.0
    %174 = vmatprep.subr.mxu0 0.0
    %175 = vmatpush2.msra.mxu0 0.0
    %176 = vmatprep.subr.mxu0 0.0
    %177 = vmatpush2.msra.mxu0 0.0
    %178 = vmatprep.subr.mxu0 0.0
    %179 = vmatpush2.msra.mxu0 0.0
    %180 = vmatprep.mubr.f32.mxu0 0.0
    %181 = vmatmul.mubr.f32.gmra.mxu0 %v89
    %v182 = vpop.f32.mrf.mxu0
    %v183 = vadd.f32 %v50, %v182
    %v184 = vpop.f32.mrf.mxu0
    %185 = vmatprep.mubr.f32.mxu0 0.0
    %186 = vmatmul.mubr.f32.gmra.mxu0 %v92
    %v187 = vpop.f32.mrf.mxu0
    %v188 = vadd.f32 %v55, %v187
    %v189 = vpop.f32.mrf.mxu0
    %190 = vmatprep.mubr.f32.mxu0 0.0
    %191 = vmatmul.mubr.f32.gmra.mxu0 %v95
    %v192 = vpop.f32.mrf.mxu0
    %v193 = vadd.f32 %v60, %v192
    %v194 = vpop.f32.mrf.mxu0
    %195 = vmatprep.mubr.f32.mxu0 0.0
    %196 = vmatmul.mubr.f32.gmra.mxu0 %v98
    %v197 = vpop.f32.mrf.mxu0
    %v198 = vadd.f32 %v65, %v197
    %v199 = vpop.f32.mrf.mxu0
    %200 = vmatprep.mubr.f32.mxu0 0.0
    %201 = vmatmul.mubr.f32.gmra.mxu0 %v101
    %v202 = vpop.f32.mrf.mxu0
    %v203 = vadd.f32 %v70, %v202
    %v204 = vpop.f32.mrf.mxu0
    %205 = vmatprep.mubr.f32.mxu0 0.0
    %206 = vmatmul.mubr.f32.gmra.mxu0 %v104
    %v207 = vpop.f32.mrf.mxu0
    %v208 = vadd.f32 %v75, %v207
    %v209 = vpop.f32.mrf.mxu0
    %210 = vmatprep.mubr.f32.mxu0 0.0
    %211 = vmatmul.mubr.f32.gmra.mxu0 %v107
    %v212 = vpop.f32.mrf.mxu0
    %v213 = vadd.f32 %v80, %v212
    %v214 = vpop.f32.mrf.mxu0
    %215 = vmatprep.mubr.f32.mxu0 0.0
    %216 = vmatmul.mubr.f32.gmra.mxu0 %v110
    %v217 = vpop.f32.mrf.mxu0
    %v218 = vadd.f32 %v85, %v217
    %v219 = vpop.f32.mrf.mxu0
    %220 = vdwg.mxu0
    %v221 = vmax.f32 %v183, 0.0
    %v222 = vmax.f32 %v188, 0.0
    %v223 = vmax.f32 %v193, 0.0
    %v224 = vmax.f32 %v198, 0.0
    %v225 = vmax.f32 %v203, 0.0
    %v226 = vmax.f32 %v208, 0.0
    %v227 = vmax.f32 %v213, 0.0
    %v228 = vmax.f32 %v218, 0.0
    %v229 = vld [vmem:[%s3] sm:$0xff]
    %v230 = vld [vmem:[%s3 + $0x8] sm:$0xff]
    %v231 = vld [vmem:[%s3 + $0x10] sm:$0xff]
    %v232 = vld [vmem:[%s3 + $0x18] sm:$0xff]
    %v233 = vld [vmem:[%s4] sm:$0xff]
    %v234 = vld [vmem:[%s4 + $0x8] sm:$0xff]
    %v235 = vld [vmem:[%s4 + $0x10] sm:$0xff]
    %v236 = vld [vmem:[%s4 + $0x18] sm:$0xff]
    %238 = vset.pattern.permute.xlu0 0
    %239 = vperm.xlu0 %238, %v233
    %v240 = vpop.permute.xlu0 %239
    %243 = vset.pattern.permute.xlu0 0
    %244 = vperm.xlu0 %243, %v234
    %v245 = vpop.permute.xlu0 %244
    %248 = vset.pattern.permute.xlu0 0
    %249 = vperm.xlu0 %248, %v235
    %v250 = vpop.permute.xlu0 %249
    %253 = vset.pattern.permute.xlu0 0
    %254 = vperm.xlu0 %253, %v236
    %v255 = vpop.permute.xlu0 %254
    %vm257 = vcmask 523264
    %v259 = vsel %vm257, %v229, 0
    %v262 = vsel %vm257, %v230, 0
    %v265 = vsel %vm257, %v231, 0
    %v268 = vsel %vm257, %v232, 0
    %270 = vmatprep.subr.mxu0 0.0
    %271 = vmatpush1.msra.mxu0 0.0
    %272 = vmatprep.subr.mxu0 0.0
    %273 = vmatpush1.msra.mxu0 0.0
    %274 = vmatprep.subr.mxu0 0.0
    %275 = vmatpush1.msra.mxu0 0.0
    %276 = vmatprep.subr.mxu0 0.0
    %277 = vmatpush1.msra.mxu0 0.0
    %278 = vmatprep.subr.mxu0 0.0
    %279 = vmatpush1.msra.mxu0 0.0
    %280 = vmatprep.subr.mxu0 0.0
    %281 = vmatpush1.msra.mxu0 0.0
    %282 = vmatprep.subr.mxu0 0.0
    %283 = vmatpush1.msra.mxu0 0.0
    %284 = vmatprep.subr.mxu0 0.0
    %285 = vmatpush1.msra.mxu0 0.0
    %286 = vmatprep.subr.mxu0 0.0
    %287 = vmatpush1.msra.mxu0 %v228
    %288 = vmatprep.subr.mxu0 0.0
    %289 = vmatpush1.msra.mxu0 %v227
    %290 = vmatprep.subr.mxu0 0.0
    %291 = vmatpush1.msra.mxu0 %v226
    %292 = vmatprep.subr.mxu0 0.0
    %293 = vmatpush1.msra.mxu0 %v225
    %294 = vmatprep.subr.mxu0 0.0
    %295 = vmatpush1.msra.mxu0 %v224
    %296 = vmatprep.subr.mxu0 0.0
    %297 = vmatpush1.msra.mxu0 %v223
    %298 = vmatprep.subr.mxu0 0.0
    %299 = vmatpush1.msra.mxu0 %v222
    %300 = vmatprep.subr.mxu0 0.0
    %301 = vmatpush1.msra.mxu0 %v221
    %302 = vmatprep.subr.mxu0 0.0
    %303 = vmatpush2.msra.mxu0 0.0
    %304 = vmatprep.subr.mxu0 0.0
    %305 = vmatpush2.msra.mxu0 0.0
    %306 = vmatprep.subr.mxu0 0.0
    %307 = vmatpush2.msra.mxu0 0.0
    %308 = vmatprep.subr.mxu0 0.0
    %309 = vmatpush2.msra.mxu0 0.0
    %310 = vmatprep.subr.mxu0 0.0
    %311 = vmatpush2.msra.mxu0 0.0
    %312 = vmatprep.subr.mxu0 0.0
    %313 = vmatpush2.msra.mxu0 0.0
    %314 = vmatprep.subr.mxu0 0.0
    %315 = vmatpush2.msra.mxu0 0.0
    %316 = vmatprep.subr.mxu0 0.0
    %317 = vmatpush2.msra.mxu0 0.0
    %318 = vmatprep.subr.mxu0 0.0
    %319 = vmatpush2.msra.mxu0 0.0
    %320 = vmatprep.subr.mxu0 0.0
    %321 = vmatpush2.msra.mxu0 0.0
    %322 = vmatprep.subr.mxu0 0.0
    %323 = vmatpush2.msra.mxu0 0.0
    %324 = vmatprep.subr.mxu0 0.0
    %325 = vmatpush2.msra.mxu0 0.0
    %326 = vmatprep.subr.mxu0 0.0
    %327 = vmatpush2.msra.mxu0 0.0
    %328 = vmatprep.subr.mxu0 0.0
    %329 = vmatpush2.msra.mxu0 0.0
    %330 = vmatprep.subr.mxu0 0.0
    %331 = vmatpush2.msra.mxu0 0.0
    %332 = vmatprep.subr.mxu0 0.0
    %333 = vmatpush2.msra.mxu0 0.0
    %334 = vmatprep.mubr.f32.mxu0 0.0
    %335 = vmatmul.mubr.f32.gmra.mxu0 %v259
    %v336 = vpop.f32.mrf.mxu0
    %v337 = vadd.f32 %v240, %v336
    %v338 = vpop.f32.mrf.mxu0
    %339 = vmatprep.mubr.f32.mxu0 0.0
    %340 = vmatmul.mubr.f32.gmra.mxu0 %v262
    %v341 = vpop.f32.mrf.mxu0
    %v342 = vadd.f32 %v245, %v341
    %v343 = vpop.f32.mrf.mxu0
    %344 = vmatprep.mubr.f32.mxu0 0.0
    %345 = vmatmul.mubr.f32.gmra.mxu0 %v265
    %v346 = vpop.f32.mrf.mxu0
    %v347 = vadd.f32 %v250, %v346
    %v348 = vpop.f32.mrf.mxu0
    %349 = vmatprep.mubr.f32.mxu0 0.0
    %350 = vmatmul.mubr.f32.gmra.mxu0 %v268
    %v351 = vpop.f32.mrf.mxu0
    %v352 = vadd.f32 %v255, %v351
    %v353 = vpop.f32.mrf.mxu0
    %354 = vdwg.mxu0
    %v355 = vmax.f32 %v337, 0.0
    %v356 = vmax.f32 %v342, 0.0
    %v357 = vmax.f32 %v347, 0.0
    %v358 = vmax.f32 %v352, 0.0
    %v359 = vld [vmem:[%s5] sm:$0x1]
    %v360 = vld [vmem:[#allocation2] sm:$0x1]
    %362 = vset.pattern.permute.xlu0 0
    %363 = vperm.xlu0 %362, %v360
    %v364 = vpop.permute.xlu0 %363
    %v366 = vlaneseq
    %v367 = vshrl.u32 %v366, 7
    %v368 = vsub.s32 0, %v367
    %v369 = vrot.slane %v364, %v368
    %vm370 = vcmask 261120
    %v372 = vsel %vm370, %v359, 0
    %374 = vmatprep.subr.mxu0 0.0
    %375 = vmatpush1.msra.mxu0 0.0
    %376 = vmatprep.subr.mxu0 0.0
    %377 = vmatpush1.msra.mxu0 0.0
    %378 = vmatprep.subr.mxu0 0.0
    %379 = vmatpush1.msra.mxu0 0.0
    %380 = vmatprep.subr.mxu0 0.0
    %381 = vmatpush1.msra.mxu0 0.0
    %382 = vmatprep.subr.mxu0 0.0
    %383 = vmatpush1.msra.mxu0 0.0
    %384 = vmatprep.subr.mxu0 0.0
    %385 = vmatpush1.msra.mxu0 0.0
    %386 = vmatprep.subr.mxu0 0.0
    %387 = vmatpush1.msra.mxu0 0.0
    %388 = vmatprep.subr.mxu0 0.0
    %389 = vmatpush1.msra.mxu0 0.0
    %390 = vmatprep.subr.mxu0 0.0
    %391 = vmatpush1.msra.mxu0 0.0
    %392 = vmatprep.subr.mxu0 0.0
    %393 = vmatpush1.msra.mxu0 0.0
    %394 = vmatprep.subr.mxu0 0.0
    %395 = vmatpush1.msra.mxu0 0.0
    %396 = vmatprep.subr.mxu0 0.0
    %397 = vmatpush1.msra.mxu0 0.0
    %398 = vmatprep.subr.mxu0 0.0
    %399 = vmatpush1.msra.mxu0 %v358
    %400 = vmatprep.subr.mxu0 0.0
    %401 = vmatpush1.msra.mxu0 %v357
    %402 = vmatprep.subr.mxu0 0.0
    %403 = vmatpush1.msra.mxu0 %v356
    %404 = vmatprep.subr.mxu0 0.0
    %405 = vmatpush1.msra.mxu0 %v355
    %406 = vmatprep.subr.mxu0 0.0
    %407 = vmatpush2.msra.mxu0 0.0
    %408 = vmatprep.subr.mxu0 0.0
    %409 = vmatpush2.msra.mxu0 0.0
    %410 = vmatprep.subr.mxu0 0.0
    %411 = vmatpush2.msra.mxu0 0.0
    %412 = vmatprep.subr.mxu0 0.0
    %413 = vmatpush2.msra.mxu0 0.0
    %414 = vmatprep.subr.mxu0 0.0
    %415 = vmatpush2.msra.mxu0 0.0
    %416 = vmatprep.subr.mxu0 0.0
    %417 = vmatpush2.msra.mxu0 0.0
    %418 = vmatprep.subr.mxu0 0.0
    %419 = vmatpush2.msra.mxu0 0.0
    %420 = vmatprep.subr.mxu0 0.0
    %421 = vmatpush2.msra.mxu0 0.0
    %422 = vmatprep.subr.mxu0 0.0
    %423 = vmatpush2.msra.mxu0 0.0
    %424 = vmatprep.subr.mxu0 0.0
    %425 = vmatpush2.msra.mxu0 0.0
    %426 = vmatprep.subr.mxu0 0.0
    %427 = vmatpush2.msra.mxu0 0.0
    %428 = vmatprep.subr.mxu0 0.0
    %429 = vmatpush2.msra.mxu0 0.0
    %430 = vmatprep.subr.mxu0 0.0
    %431 = vmatpush2.msra.mxu0 0.0
    %432 = vmatprep.subr.mxu0 0.0
    %433 = vmatpush2.msra.mxu0 0.0
    %434 = vmatprep.subr.mxu0 0.0
    %435 = vmatpush2.msra.mxu0 0.0
    %436 = vmatprep.subr.mxu0 0.0
    %437 = vmatpush2.msra.mxu0 0.0
    %438 = vmatprep.mubr.f32.mxu0 0.0
    %439 = vmatmul.mubr.f32.gmra.mxu0 %v372
    %v440 = vpop.f32.mrf.mxu0
    %v441 = vadd.f32 %v369, %v440
    %v442 = vpop.f32.mrf.mxu0
    %443 = vdwg.mxu0
    %444 = vst [vmem:[#allocation3] sm:$0x1] %v441
    // Predicated region
    $region30: #{tpu_custom_call.1} parent=1 // pred_check
      _
    $region31: #{tpu_custom_call.1} parent=1 // pred_check_branch
      %446 = sbr.rel (0) target = $region33
    $region32: #{tpu_custom_call.1} parent=1 // pred_region
      %s448 = ssub.s32 16, 16
      %449 = vsyncadd [#allocation4], %s448
      %s451 = sshll.u32 [#allocation3], 4
      %s452 = int_to_ptr.vmem [resolvable:$true] %s451
      %454 = dma.vmem_to_hbm [thread:$0]  %s452, 16, %s7, [#allocation4]
    $region33: #{tpu_custom_call.1} parent=1 // pred_fallthru
      _
    // Predicated region
    $region34: #{tpu_custom_call.1} parent=1 // pred_check
      _
    $region35: #{tpu_custom_call.1} parent=1 // pred_check_branch
      %456 = sbr.rel (0) target = $region37
    $region36: #{tpu_custom_call.1} parent=1 // pred_region
      %457 = dma.done [#allocation4], 16
    $region37: #{tpu_custom_call.1} parent=1 // pred_fallthru
      _
    %458 = vsyncpa [#allocation4], 1

</llo_original>
